<compile_context>
chip_gen: v7x
topology: tpu7x:2x2x1
jax: 0.10.0
libtpu: 0.0.40
codegen_flags: <defaults>
</compile_context>

<pallas_src>
import functools

import jax
import jax.numpy as jnp
import numpy as np
from jax.experimental import pallas as pl
from jax.experimental.pallas import tpu as pltpu


def _elu(x):
    # nn.ELU(alpha=1.0); exp argument clamped to <= 0 so bf16/f32 are both safe.
    return jnp.where(x > 0, x, jnp.exp(jnp.minimum(x, 0.0)) - 1.0)


def _id_split_kernel(x_ref, w1_ref, b1_ref, w2_ref, b2_ref, w3_ref, b3_ref,
                     w4_ref, b4_ref, out_ref, *, compute_dtype):
    # x_ref : (Bt, 34)  bf16   [common flatten (c*16+l) | loc_ID(2)]
    # w1    : (34, 320) bf16   blockdiag(BN-folded conv1-as-dense, Wi1)
    # w2    : (256,256) bf16   conv2-as-dense
    # w3    : (320, 64) bf16   blockdiag(Wc, Wi2)
    # w4    : (64, 32)  bf16   final Linear, rows permuted to [common|individual]
    # biases: (1, N)    f32
    # out   : (Bt, 32)  f32

    # Stage 1: conv1 (BN folded) + individual Linear(2->64), one matmul + ELU.
    a1 = _elu((jnp.dot(x_ref[...], w1_ref[...],
                       preferred_element_type=jnp.float32)
               + b1_ref[...]).astype(compute_dtype))            # (Bt, 320)
    h1 = a1[:, :256]      # conv1 activations (PyTorch NCL flatten order)
    i1 = a1[:, 256:]      # individual-path activations (64)

    # Stage 2: conv2-as-dense + ELU.
    h2 = _elu((jnp.dot(h1.astype(jnp.bfloat16), w2_ref[...],
                       preferred_element_type=jnp.float32)
               + b2_ref[...]).astype(compute_dtype))            # (Bt, 256)

    # Stage 3: [h2 | i1] @ blockdiag(Wc, Wi2) -> [c_out(32) | i2(32)], ELU.
    a3_in = jnp.concatenate([h2, i1], axis=-1).astype(jnp.bfloat16)   # (Bt, 320)
    a3 = _elu((jnp.dot(a3_in, w3_ref[...],
                       preferred_element_type=jnp.float32)
               + b3_ref[...]).astype(compute_dtype))            # (Bt, 64)

    # Final: Linear(64->32) on torch.cat((i2, c_out)) folded into row-permuted
    # W4 (so no in-kernel reordering), then Tanh in f32.
    out_ref[...] = jnp.tanh(
        jnp.dot(a3.astype(jnp.bfloat16), w4_ref[...],
                preferred_element_type=jnp.float32) + b4_ref[...])


# ----------------------------- parameters -----------------------------------


def init_params(key):
    """PyTorch-layout parameters for add_BN=False, output_dim=[512] (L=16)."""
    ks = jax.random.split(key, 16)

    def rnd(k, shape, s=0.1):
        return (s * jax.random.normal(k, shape)).astype(jnp.float32)

    return dict(
        # nn.BatchNorm1d(2) (eval-mode running stats)
        bn_gamma=1.0 + rnd(ks[0], (2,)),
        bn_beta=rnd(ks[1], (2,)),
        bn_mean=rnd(ks[2], (2,)),
        bn_var=1.0 + jnp.abs(rnd(ks[3], (2,))),
        # Conv1d(2->32, k=5, s=2, p=2), Conv1d(32->64, k=3, s=2, p=1)
        conv1_w=rnd(ks[4], (32, 2, 5)), conv1_b=rnd(ks[5], (32,)),
        conv2_w=rnd(ks[6], (64, 32, 3)), conv2_b=rnd(ks[7], (64,)),
        # common_feature_dnn Linear(256, 32)
        fc_c_w=rnd(ks[8], (32, 256)), fc_c_b=rnd(ks[9], (32,)),
        # individual_feature_dnn Linear(2, 64), Linear(64, 32)
        fc_i1_w=rnd(ks[10], (64, 2)), fc_i1_b=rnd(ks[11], (64,)),
        fc_i2_w=rnd(ks[12], (32, 64)), fc_i2_b=rnd(ks[13], (32,)),
        # final_output Linear(64, 32)
        fc_f_w=rnd(ks[14], (32, 64)), fc_f_b=rnd(ks[15], (32,)),
    )


def _conv1d_as_dense(w_pt, b_pt, l_in, stride, pad):
    """Conv1d weight (C_out, C_in, K) -> dense (C_in*L_in, C_out*L_out) + bias.

    Flat indices follow PyTorch NCL flatten order (channel*L + position); zero
    padding is encoded as structurally-zero entries of the dense weight.
    """
    w = np.asarray(w_pt, dtype=np.float32)
    b = np.asarray(b_pt, dtype=np.float32)
    c_out, c_in, k_sz = w.shape
    l_out = (l_in + 2 * pad - k_sz) // stride + 1
    dense = np.zeros((c_in * l_in, c_out * l_out), dtype=np.float32)
    for t in range(l_out):
        for k in range(k_sz):
            l = stride * t + k - pad
            if 0 <= l < l_in:
                for ci in range(c_in):
                    dense[ci * l_in + l, t::l_out] = w[:, ci, k]
    bias = np.repeat(b, l_out)
    return dense, bias


def fold_params(params):
    """Host-side precompute: conv-as-dense, BN folding, block-diagonal packing."""
    eps = 1e-5
    w1d, b1d = _conv1d_as_dense(params["conv1_w"], params["conv1_b"], 16, 2, 2)
    w2d, b2d = _conv1d_as_dense(params["conv2_w"], params["conv2_b"], 8, 2, 1)

    # Fold eval-mode BatchNorm1d(2) (x*s + sh per input channel) into conv1.
    s = np.asarray(params["bn_gamma"]) / np.sqrt(np.asarray(params["bn_var"]) + eps)
    sh = np.asarray(params["bn_beta"]) - np.asarray(params["bn_mean"]) * s
    s_rows = np.repeat(s, 16)            # row index = ci*16 + l
    sh_rows = np.repeat(sh, 16)
    w1f = w1d * s_rows[:, None]
    b1f = b1d + sh_rows @ w1d

    wi1 = np.asarray(params["fc_i1_w"], np.float32).T     # (2, 64)
    bi1 = np.asarray(params["fc_i1_b"], np.float32)
    wc = np.asarray(params["fc_c_w"], np.float32).T       # (256, 32)
    bc = np.asarray(params["fc_c_b"], np.float32)
    wi2 = np.asarray(params["fc_i2_w"], np.float32).T     # (64, 32)
    bi2 = np.asarray(params["fc_i2_b"], np.float32)
    wft = np.asarray(params["fc_f_w"], np.float32).T      # (64, 32)
    bfin = np.asarray(params["fc_f_b"], np.float32)

    # Stage 1: [xflat(32) | loc(2)] -> [conv1(256) | ind1(64)]
    w1 = np.zeros((34, 320), np.float32)
    w1[:32, :256] = w1f
    w1[32:, 256:] = wi1
    b1 = np.concatenate([b1f, bi1])

    # Stage 3: [h2(256) | i1(64)] -> [c_out(32) | i2(32)]
    w3 = np.zeros((320, 64), np.float32)
    w3[:256, :32] = wc
    w3[256:, 32:] = wi2
    b3 = np.concatenate([bc, bi2])

    # Final: torch order is cat((i_output, c_output)); our a3 is [c_out | i2],
    # so permute rows of Wf.T accordingly: common half first, individual second.
    w4 = np.concatenate([wft[32:], wft[:32]], axis=0)      # (64, 32)

    def as_bf16(a):
        return jnp.asarray(a, dtype=jnp.bfloat16)

    def as_f32_row(a):
        return jnp.asarray(a, dtype=jnp.float32).reshape(1, -1)

    return dict(
        w1=as_bf16(w1), b1=as_f32_row(b1),
        w2=as_bf16(w2d), b2=as_f32_row(b2d),
        w3=as_bf16(w3), b3=as_f32_row(b3),
        w4=as_bf16(w4), b4=as_f32_row(bfin),
    )


# ------------------------------- wrapper -------------------------------------


def _round_up(x, m):
    return ((x + m - 1) // m) * m


def _default_compute_dtype():
    # bf16 ELU intermediates on v6e/v7x (bf16 VPU/EUP); f32 on v5e.
    try:
        kind = jax.devices()[0].device_kind.lower()
    except Exception:
        return jnp.bfloat16
    if "v5e" in kind or "v5 lite" in kind or "v5lite" in kind:
        return jnp.float32
    return jnp.bfloat16


def id_splitting_cnn_dnn(features, loc_id, kernel_params, *,
                         block_b=1024, compute_dtype=None):
    """features: (B, 3, 16) NCL (PyTorch layout); loc_id: (B, 2).
    Returns (output (B, 32), None) matching the module's forward."""
    B = features.shape[0]
    if compute_dtype is None:
        compute_dtype = _default_compute_dtype()

    # features[:, 1:, :] is the 2-channel common input; reshape gives the
    # PyTorch NCL flat order (c*16 + l) that matches the dense conv1 rows.
    xflat = features[:, 1:, :].reshape(B, 32)
    loc = jnp.asarray(loc_id).astype(features.dtype).reshape(B, 2)
    # One bf16 (B, 34) slab: halves input HBM traffic and removes the padded
    # (B, 2) DMA entirely (individual path fused into the stage-1 matmul).
    xcat = jnp.concatenate([xflat, loc], axis=1).astype(jnp.bfloat16)

    # Batch tile: large (multiple of 8), with an even number of grid steps >= 2
    # for non-tiny batches so both v7x TensorCores get work. No wrapper-side
    # padding — Pallas masks the partial last block.
    n_steps = max(1, pl.cdiv(B, block_b))
    if B >= 16 and n_steps < 2:
        n_steps = 2
    if n_steps > 1 and n_steps % 2:
        n_steps += 1
    bt = _round_up(max(pl.cdiv(B, n_steps), 1), 8)
    grid = pl.cdiv(B, bt)

    p = kernel_params
    weights = [p["w1"], p["b1"], p["w2"], p["b2"],
               p["w3"], p["b3"], p["w4"], p["b4"]]

    kernel = functools.partial(_id_split_kernel, compute_dtype=compute_dtype)

    out = pl.pallas_call(
        kernel,
        out_shape=jax.ShapeDtypeStruct((B, 32), jnp.float32),
        grid=(grid,),
        in_specs=[pl.BlockSpec((bt, 34), lambda i: (i, 0))]
                 + [pl.BlockSpec(w.shape, lambda i: (0, 0)) for w in weights],
        out_specs=pl.BlockSpec((bt, 32), lambda i: (i, 0)),
        compiler_params=pltpu.CompilerParams(
            dimension_semantics=("parallel",),
            vmem_limit_bytes=32 * 1024 * 1024),
    )(xcat, *weights)

    return out, None


if __name__ == "__main__":
    # TODO(synk): BatchNorm1d(2) is folded in eval mode (running stats);
    # training-mode batch statistics are not reproduced.
    key = jax.random.PRNGKey(0)
    k_feat, k_loc, k_par = jax.random.split(key, 3)
    B, L = 2, 16
    features = jax.random.normal(k_feat, (B, 3, L), dtype=jnp.float32)
    loc_id = jax.random.normal(k_loc, (B, 2), dtype=jnp.float32)
    kernel_params = fold_params(init_params(k_par))

    out, latent_value = id_splitting_cnn_dnn(features, loc_id, kernel_params)
    out = jax.block_until_ready(out)
    assert out.shape == (B, 32) and latent_value is None
    assert bool(jnp.all(jnp.isfinite(out)))
    print("KERNEL_OK")
</pallas_src>

<mosaic_0001>
module attributes {stable_mosaic.version = 11 : i64} {
  func.func @_id_split_kernel(%arg0: i32, %arg1: memref<8x34xbf16, #tpu.memory_space<vmem>>, %arg2: memref<34x320xbf16, #tpu.memory_space<vmem>>, %arg3: memref<1x320xf32, #tpu.memory_space<vmem>>, %arg4: memref<256x256xbf16, #tpu.memory_space<vmem>>, %arg5: memref<1x256xf32, #tpu.memory_space<vmem>>, %arg6: memref<320x64xbf16, #tpu.memory_space<vmem>>, %arg7: memref<1x64xf32, #tpu.memory_space<vmem>>, %arg8: memref<64x32xbf16, #tpu.memory_space<vmem>>, %arg9: memref<1x32xf32, #tpu.memory_space<vmem>>, %arg10: memref<8x32xf32, #tpu.memory_space<vmem>>) attributes {dimension_semantics = [#tpu.dimension_semantics<parallel>], iteration_bounds = array<i64: 1>, scalar_prefetch = 0 : i64, scratch_operands = 0 : i64, tpu.core_type = #tpu.core_type<tc>, window_params = [{transform_indices = @transform_0, window_bounds = array<i64: 8, 34>}, {pipeline_mode = #tpu.pipeline_mode<synchronous>, transform_indices = @transform_1, window_bounds = array<i64: 34, 320>}, {pipeline_mode = #tpu.pipeline_mode<synchronous>, transform_indices = @transform_2, window_bounds = array<i64: 1, 320>}, {pipeline_mode = #tpu.pipeline_mode<synchronous>, transform_indices = @transform_3, window_bounds = array<i64: 256, 256>}, {pipeline_mode = #tpu.pipeline_mode<synchronous>, transform_indices = @transform_4, window_bounds = array<i64: 1, 256>}, {pipeline_mode = #tpu.pipeline_mode<synchronous>, transform_indices = @transform_5, window_bounds = array<i64: 320, 64>}, {pipeline_mode = #tpu.pipeline_mode<synchronous>, transform_indices = @transform_6, window_bounds = array<i64: 1, 64>}, {pipeline_mode = #tpu.pipeline_mode<synchronous>, transform_indices = @transform_7, window_bounds = array<i64: 64, 32>}, {pipeline_mode = #tpu.pipeline_mode<synchronous>, transform_indices = @transform_8, window_bounds = array<i64: 1, 32>}, {transform_indices = @transform_9, window_bounds = array<i64: 8, 32>}]} {
    %c0 = arith.constant 0 : index
    %c0_0 = arith.constant 0 : index
    %0 = vector.load %arg1[%c0, %c0_0] : memref<8x34xbf16, #tpu.memory_space<vmem>>, vector<8x34xbf16>
    %c0_1 = arith.constant 0 : index
    %c0_2 = arith.constant 0 : index
    %1 = vector.load %arg2[%c0_1, %c0_2] : memref<34x320xbf16, #tpu.memory_space<vmem>>, vector<34x320xbf16>
    %cst = arith.constant dense<0.000000e+00> : vector<8x320xf32>
    %2 = tpu.matmul %0, %1, %cst {dimension_numbers = #tpu.dot_dimension_numbers<[1], [0], [0], [1], [0, 0, 1, 1], [], []>} : vector<8x34xbf16>, vector<34x320xbf16>, vector<8x320xf32> -> vector<8x320xf32>
    %c0_3 = arith.constant 0 : index
    %c0_4 = arith.constant 0 : index
    %3 = vector.load %arg3[%c0_3, %c0_4] : memref<1x320xf32, #tpu.memory_space<vmem>>, vector<1x320xf32>
    %4 = vector.broadcast %3 : vector<1x320xf32> to vector<8x320xf32>
    %5 = arith.addf %2, %4 : vector<8x320xf32>
    %6 = arith.truncf %5 : vector<8x320xf32> to vector<8x320xbf16>
    %cst_5 = arith.constant 0.000000e+00 : bf16
    %7 = vector.broadcast %cst_5 : bf16 to vector<8x320xbf16>
    %8 = arith.cmpf ogt, %6, %7 : vector<8x320xbf16>
    %cst_6 = arith.constant 0.000000e+00 : bf16
    %9 = vector.broadcast %cst_6 : bf16 to vector<8x320xbf16>
    %10 = arith.minimumf %6, %9 : vector<8x320xbf16>
    %11 = math.exp %10 : vector<8x320xbf16>
    %cst_7 = arith.constant 1.000000e+00 : bf16
    %12 = vector.broadcast %cst_7 : bf16 to vector<8x320xbf16>
    %13 = arith.subf %11, %12 : vector<8x320xbf16>
    %14 = arith.select %8, %6, %13 : vector<8x320xi1>, vector<8x320xbf16>
    %15 = vector.extract_strided_slice %14 {offsets = [0, 0], sizes = [8, 256], strides = [1, 1]} : vector<8x320xbf16> to vector<8x256xbf16>
    %16 = vector.extract_strided_slice %14 {offsets = [0, 256], sizes = [8, 64], strides = [1, 1]} : vector<8x320xbf16> to vector<8x64xbf16>
    %c0_8 = arith.constant 0 : index
    %c0_9 = arith.constant 0 : index
    %17 = vector.load %arg4[%c0_8, %c0_9] : memref<256x256xbf16, #tpu.memory_space<vmem>>, vector<256x256xbf16>
    %cst_10 = arith.constant dense<0.000000e+00> : vector<8x256xf32>
    %18 = tpu.matmul %15, %17, %cst_10 {dimension_numbers = #tpu.dot_dimension_numbers<[1], [0], [0], [1], [0, 0, 1, 1], [], []>} : vector<8x256xbf16>, vector<256x256xbf16>, vector<8x256xf32> -> vector<8x256xf32>
    %c0_11 = arith.constant 0 : index
    %c0_12 = arith.constant 0 : index
    %19 = vector.load %arg5[%c0_11, %c0_12] : memref<1x256xf32, #tpu.memory_space<vmem>>, vector<1x256xf32>
    %20 = vector.broadcast %19 : vector<1x256xf32> to vector<8x256xf32>
    %21 = arith.addf %18, %20 : vector<8x256xf32>
    %22 = arith.truncf %21 : vector<8x256xf32> to vector<8x256xbf16>
    %cst_13 = arith.constant 0.000000e+00 : bf16
    %23 = vector.broadcast %cst_13 : bf16 to vector<8x256xbf16>
    %24 = arith.cmpf ogt, %22, %23 : vector<8x256xbf16>
    %cst_14 = arith.constant 0.000000e+00 : bf16
    %25 = vector.broadcast %cst_14 : bf16 to vector<8x256xbf16>
    %26 = arith.minimumf %22, %25 : vector<8x256xbf16>
    %27 = math.exp %26 : vector<8x256xbf16>
    %cst_15 = arith.constant 1.000000e+00 : bf16
    %28 = vector.broadcast %cst_15 : bf16 to vector<8x256xbf16>
    %29 = arith.subf %27, %28 : vector<8x256xbf16>
    %30 = arith.select %24, %22, %29 : vector<8x256xi1>, vector<8x256xbf16>
    %31 = tpu.concatenate %30, %16 in 1 : vector<8x256xbf16>, vector<8x64xbf16> -> vector<8x320xbf16>
    %c0_16 = arith.constant 0 : index
    %c0_17 = arith.constant 0 : index
    %32 = vector.load %arg6[%c0_16, %c0_17] : memref<320x64xbf16, #tpu.memory_space<vmem>>, vector<320x64xbf16>
    %cst_18 = arith.constant dense<0.000000e+00> : vector<8x64xf32>
    %33 = tpu.matmul %31, %32, %cst_18 {dimension_numbers = #tpu.dot_dimension_numbers<[1], [0], [0], [1], [0, 0, 1, 1], [], []>} : vector<8x320xbf16>, vector<320x64xbf16>, vector<8x64xf32> -> vector<8x64xf32>
    %c0_19 = arith.constant 0 : index
    %c0_20 = arith.constant 0 : index
    %34 = vector.load %arg7[%c0_19, %c0_20] : memref<1x64xf32, #tpu.memory_space<vmem>>, vector<1x64xf32>
    %35 = vector.broadcast %34 : vector<1x64xf32> to vector<8x64xf32>
    %36 = arith.addf %33, %35 : vector<8x64xf32>
    %37 = arith.truncf %36 : vector<8x64xf32> to vector<8x64xbf16>
    %cst_21 = arith.constant 0.000000e+00 : bf16
    %38 = vector.broadcast %cst_21 : bf16 to vector<8x64xbf16>
    %39 = arith.cmpf ogt, %37, %38 : vector<8x64xbf16>
    %cst_22 = arith.constant 0.000000e+00 : bf16
    %40 = vector.broadcast %cst_22 : bf16 to vector<8x64xbf16>
    %41 = arith.minimumf %37, %40 : vector<8x64xbf16>
    %42 = math.exp %41 : vector<8x64xbf16>
    %cst_23 = arith.constant 1.000000e+00 : bf16
    %43 = vector.broadcast %cst_23 : bf16 to vector<8x64xbf16>
    %44 = arith.subf %42, %43 : vector<8x64xbf16>
    %45 = arith.select %39, %37, %44 : vector<8x64xi1>, vector<8x64xbf16>
    %c0_24 = arith.constant 0 : index
    %c0_25 = arith.constant 0 : index
    %46 = vector.load %arg8[%c0_24, %c0_25] : memref<64x32xbf16, #tpu.memory_space<vmem>>, vector<64x32xbf16>
    %cst_26 = arith.constant dense<0.000000e+00> : vector<8x32xf32>
    %47 = tpu.matmul %45, %46, %cst_26 {dimension_numbers = #tpu.dot_dimension_numbers<[1], [0], [0], [1], [0, 0, 1, 1], [], []>} : vector<8x64xbf16>, vector<64x32xbf16>, vector<8x32xf32> -> vector<8x32xf32>
    %c0_27 = arith.constant 0 : index
    %c0_28 = arith.constant 0 : index
    %48 = vector.load %arg9[%c0_27, %c0_28] : memref<1x32xf32, #tpu.memory_space<vmem>>, vector<1x32xf32>
    %49 = vector.broadcast %48 : vector<1x32xf32> to vector<8x32xf32>
    %50 = arith.addf %47, %49 : vector<8x32xf32>
    %51 = math.tanh %50 : vector<8x32xf32>
    %c0_29 = arith.constant 0 : index
    %c0_30 = arith.constant 0 : index
    %52 = vector.load %arg10[%c0_29, %c0_30] : memref<8x32xf32, #tpu.memory_space<vmem>>, vector<8x32xf32>
    tpu.vector_store %arg10[%c0_29, %c0_30], %51 {strides = array<i32>} : memref<8x32xf32, #tpu.memory_space<vmem>>, vector<8x32xf32>,
    return
  }
  func.func @transform_0(%arg0: i32) -> (i32, i32) {
    %c0_i32 = arith.constant 0 : i32
    %c0_i32_0 = arith.constant 0 : i32
    return %arg0, %c0_i32 : i32, i32
  }
  func.func @transform_1(%arg0: i32) -> (i32, i32) {
    %c0_i32 = arith.constant 0 : i32
    %c0_i32_0 = arith.constant 0 : i32
    %c0_i32_1 = arith.constant 0 : i32
    return %c0_i32, %c0_i32_0 : i32, i32
  }
  func.func @transform_2(%arg0: i32) -> (i32, i32) {
    %c0_i32 = arith.constant 0 : i32
    %c0_i32_0 = arith.constant 0 : i32
    %c0_i32_1 = arith.constant 0 : i32
    return %c0_i32, %c0_i32_0 : i32, i32
  }
  func.func @transform_3(%arg0: i32) -> (i32, i32) {
    %c0_i32 = arith.constant 0 : i32
    %c0_i32_0 = arith.constant 0 : i32
    %c0_i32_1 = arith.constant 0 : i32
    return %c0_i32, %c0_i32_0 : i32, i32
  }
  func.func @transform_4(%arg0: i32) -> (i32, i32) {
    %c0_i32 = arith.constant 0 : i32
    %c0_i32_0 = arith.constant 0 : i32
    %c0_i32_1 = arith.constant 0 : i32
    return %c0_i32, %c0_i32_0 : i32, i32
  }
  func.func @transform_5(%arg0: i32) -> (i32, i32) {
    %c0_i32 = arith.constant 0 : i32
    %c0_i32_0 = arith.constant 0 : i32
    %c0_i32_1 = arith.constant 0 : i32
    return %c0_i32, %c0_i32_0 : i32, i32
  }
  func.func @transform_6(%arg0: i32) -> (i32, i32) {
    %c0_i32 = arith.constant 0 : i32
    %c0_i32_0 = arith.constant 0 : i32
    %c0_i32_1 = arith.constant 0 : i32
    return %c0_i32, %c0_i32_0 : i32, i32
  }
  func.func @transform_7(%arg0: i32) -> (i32, i32) {
    %c0_i32 = arith.constant 0 : i32
    %c0_i32_0 = arith.constant 0 : i32
    %c0_i32_1 = arith.constant 0 : i32
    return %c0_i32, %c0_i32_0 : i32, i32
  }
  func.func @transform_8(%arg0: i32) -> (i32, i32) {
    %c0_i32 = arith.constant 0 : i32
    %c0_i32_0 = arith.constant 0 : i32
    %c0_i32_1 = arith.constant 0 : i32
    return %c0_i32, %c0_i32_0 : i32, i32
  }
  func.func @transform_9(%arg0: i32) -> (i32, i32) {
    %c0_i32 = arith.constant 0 : i32
    %c0_i32_0 = arith.constant 0 : i32
    return %arg0, %c0_i32 : i32, i32
  }
}

</mosaic_0001>

<llo_original>
// kernel: tpu_custom_call.1
$region0: #{tpu_custom_call.1}
  #allocation0 [shape = 'u32[]', space=smem, size = 0x4, offset = 0x4, fixed_abs, tag = 'smem constant byte address 0x4 - core index']
  #allocation1 [shape = 'u32[144,128]{1,0:T(1,128)}', space=vmem, size = 0x12000, scoped, tag = 'internal scratch']
  %s0 = inlined_call_operand.vmem [shape: bf16[2,34], index: 0, kind: input, shape index: {}]
  %s1 = inlined_call_operand.hbm [shape: bf16[34,320], index: 1, kind: input, shape index: {}]
  %s2 = inlined_call_operand.vmem [shape: f32[1,320], index: 2, kind: input, shape index: {}]
  %s3 = inlined_call_operand.vmem [shape: bf16[256,256], index: 3, kind: input, shape index: {}]
  %s4 = inlined_call_operand.vmem [shape: f32[1,256], index: 4, kind: input, shape index: {}]
  %s5 = inlined_call_operand.vmem [shape: bf16[320,64], index: 5, kind: input, shape index: {}]
  %s6 = inlined_call_operand.vmem [shape: f32[1,64], index: 6, kind: input, shape index: {}]
  %s7 = inlined_call_operand.vmem [shape: bf16[64,32], index: 7, kind: input, shape index: {}]
  %s8 = inlined_call_operand.vmem [shape: f32[1,32], index: 8, kind: input, shape index: {}]
  %s9 = inlined_call_operand.hbm [shape: f32[2,32], index: 9, kind: output, shape index: {}]
  %s10 = sld [smem:[#allocation0]]
  $region50: #{tpu_custom_call.1} parent=0
    _
  %s12 = ssub.s32 1, %s10
  %s13 = scalar_select 0, %s12, %s10
  $region1: #{tpu_custom_call.1} parent=0
    #allocation2 [shape = 'u8[30720]{0}', space=vmem, size = 0x7800, scoped, tag = 'input window, operand 1, single buffered']
    #allocation3 [shape = 's32[1]{0}', space=sflag, size = 0x4, scoped, tag = 'scoped memory for tpu_custom_call.1']
    #allocation4 [shape = 's32[1]{0}', space=sflag, size = 0x4, scoped, tag = 'scoped memory for tpu_custom_call.1']
    #allocation5 [shape = 'u8[4096]{0}', space=vmem, size = 0x1000, scoped, tag = 'output window, operand 0, single buffered']
    %14 = vsyncpa [#allocation3], 0
    %15 = vsyncpa [#allocation4], 0
    // Predicated region
    $region2: #{tpu_custom_call.1} parent=1 // pred_check
      _
    $region3: #{tpu_custom_call.1} parent=1 // pred_check_branch
      %17 = sbr.rel (0) target = $region5
    $region4: #{tpu_custom_call.1} parent=1 // pred_region
      _
    $region5: #{tpu_custom_call.1} parent=1 // pred_fallthru
      _
    // Predicated region
    $region6: #{tpu_custom_call.1} parent=1 // pred_check
      _
    $region7: #{tpu_custom_call.1} parent=1 // pred_check_branch
      %19 = sbr.rel (0) target = $region9
    $region8: #{tpu_custom_call.1} parent=1 // pred_region
      %s21 = ssub.s32 960, 960
      %22 = vsyncadd [#allocation3], %s21
      %s23 = sshll.u32 [#allocation2], 4
      %s24 = int_to_ptr.vmem [resolvable:$true] %s23
      %29 = dma.hbm_to_vmem [thread:$0]  %s1, 960, %s24, [#allocation3], 192, 192, 12
    $region9: #{tpu_custom_call.1} parent=1 // pred_fallthru
      _
    // Predicated region
    $region10: #{tpu_custom_call.1} parent=1 // pred_check
      _
    $region11: #{tpu_custom_call.1} parent=1 // pred_check_branch
      %31 = sbr.rel (0) target = $region13
    $region12: #{tpu_custom_call.1} parent=1 // pred_region
      _
    $region13: #{tpu_custom_call.1} parent=1 // pred_fallthru
      _
    // Predicated region
    $region14: #{tpu_custom_call.1} parent=1 // pred_check
      _
    $region15: #{tpu_custom_call.1} parent=1 // pred_check_branch
      %33 = sbr.rel (0) target = $region17
    $region16: #{tpu_custom_call.1} parent=1 // pred_region
      _
    $region17: #{tpu_custom_call.1} parent=1 // pred_fallthru
      _
    // Predicated region
    $region18: #{tpu_custom_call.1} parent=1 // pred_check
      _
    $region19: #{tpu_custom_call.1} parent=1 // pred_check_branch
      %35 = sbr.rel (0) target = $region21
    $region20: #{tpu_custom_call.1} parent=1 // pred_region
      _
    $region21: #{tpu_custom_call.1} parent=1 // pred_fallthru
      _
    // Predicated region
    $region22: #{tpu_custom_call.1} parent=1 // pred_check
      _
    $region23: #{tpu_custom_call.1} parent=1 // pred_check_branch
      %37 = sbr.rel (0) target = $region25
    $region24: #{tpu_custom_call.1} parent=1 // pred_region
      _
    $region25: #{tpu_custom_call.1} parent=1 // pred_fallthru
      _
    // Predicated region
    $region26: #{tpu_custom_call.1} parent=1 // pred_check
      _
    $region27: #{tpu_custom_call.1} parent=1 // pred_check_branch
      %39 = sbr.rel (0) target = $region29
    $region28: #{tpu_custom_call.1} parent=1 // pred_region
      _
    $region29: #{tpu_custom_call.1} parent=1 // pred_fallthru
      _
    // Predicated region
    $region30: #{tpu_custom_call.1} parent=1 // pred_check
      _
    $region31: #{tpu_custom_call.1} parent=1 // pred_check_branch
      %41 = sbr.rel (0) target = $region33
    $region32: #{tpu_custom_call.1} parent=1 // pred_region
      _
    $region33: #{tpu_custom_call.1} parent=1 // pred_fallthru
      _
    // Predicated region
    $region34: #{tpu_custom_call.1} parent=1 // pred_check
      _
    $region35: #{tpu_custom_call.1} parent=1 // pred_check_branch
      %43 = sbr.rel (0) target = $region37
    $region36: #{tpu_custom_call.1} parent=1 // pred_region
      _
    $region37: #{tpu_custom_call.1} parent=1 // pred_fallthru
      _
    // Predicated region
    $region38: #{tpu_custom_call.1} parent=1 // pred_check
      _
    $region39: #{tpu_custom_call.1} parent=1 // pred_check_branch
      %45 = sbr.rel (0) target = $region41
    $region40: #{tpu_custom_call.1} parent=1 // pred_region
      %46 = dma.done [#allocation3], 960
    $region41: #{tpu_custom_call.1} parent=1 // pred_fallthru
      _
    %v49 = vld [vmem:[%s0] sm:$0x1]
    %v50 = vld [vmem:[%s0 + $0x1] sm:$0x1]
    %v51 = vld [vmem:[%s0 + $0x2] sm:$0x1]
    %v52 = vld [vmem:[%s0 + $0x3] sm:$0x1]
    %v53 = vld [vmem:[#allocation2] sm:$0xff]
    %v54 = vld [vmem:[#allocation2 + $0x8] sm:$0xf]
    %v55 = vld [vmem:[#allocation2 + $0xc] sm:$0xff]
    %v56 = vld [vmem:[#allocation2 + $0x14] sm:$0xf]
    %v57 = vld [vmem:[#allocation2 + $0x18] sm:$0xff]
    %v58 = vld [vmem:[#allocation2 + $0x20] sm:$0xf]
    %v59 = vld [vmem:[#allocation2 + $0x24] sm:$0xff]
    %v60 = vld [vmem:[#allocation2 + $0x2c] sm:$0xf]
    %v61 = vld [vmem:[#allocation2 + $0x30] sm:$0x11]
    %v62 = vld [vmem:[#allocation2 + $0x38] sm:$0x1]
    %v63 = vld [vmem:[%s2] sm:$0x7]
    %v65 = vlaneseq
    %v66 = vshrl.u32 %v65, 7
    %v67 = vsub.s32 0, %v66
    %v68 = vrot.slane %v63, %v67
    %v69 = vlaneseq
    %v70 = vshrl.u32 %v69, 7
    %v71 = vsub.s32 1, %v70
    %v72 = vrot.slane %v63, %v71
    %v73 = vlaneseq
    %v74 = vshrl.u32 %v73, 7
    %v75 = vsub.s32 2, %v74
    %v76 = vrot.slane %v63, %v75
    %v84 = vcombine.low %v49, %v50
    %v85 = vcombine.low %v51, %v52
    %v87 = vunpack.c.l.s4 1966171168
    %v88 = vunpack.c.0.s8 %v87
    %v89 = vlaneseq
    %v90 = vshrl.u32 %v89, 7
    %v91 = vsub.s32 %v88, %v90
    %v92 = vrot.slane %v84, %v91
    %v94 = vunpack.c.l.s4 1966171168
    %v95 = vunpack.c.0.s8 %v94
    %v96 = vlaneseq
    %v97 = vshrl.u32 %v96, 7
    %v98 = vsub.s32 %v95, %v97
    %v99 = vrot.slane %v85, %v98
    %v100 = vcombine.low %v92, %v99
    %v102 = vunpack.c.l.s4 1966171168
    %v103 = vunpack.c.0.s8 %v102
    %v104 = vlaneseq
    %v105 = vshrl.u32 %v104, 7
    %v106 = vsub.s32 %v103, %v105
    %v107 = vrot.slane %v100, %v106
    %v118 = vunpack.c.l.b16 %v53
    %v119 = vunpack.c.h.b16 %v53
    %v120 = vunpack.c.l.b16 %v54
    %v121 = vunpack.c.l.b16 %v55
    %v122 = vunpack.c.h.b16 %v55
    %v123 = vunpack.c.l.b16 %v56
    %v124 = vunpack.c.l.b16 %v57
    %v125 = vunpack.c.h.b16 %v57
    %v126 = vunpack.c.l.b16 %v58
    %v127 = vunpack.c.l.b16 %v59
    %v128 = vunpack.c.h.b16 %v59
    %v129 = vunpack.c.l.b16 %v60
    %v130 = vunpack.c.l.b16 %v61
    %v131 = vunpack.c.h.b16 %v61
    %v132 = vunpack.c.l.b16 %v62
    %v133 = vpack.c.b16 %v121, %v118
    %v134 = vpack.c.b16 %v122, %v119
    %v135 = vpack.c.b16 %v123, %v120
    %v136 = vpack.c.b16 %v127, %v124
    %v137 = vpack.c.b16 %v128, %v125
    %v138 = vpack.c.b16 %v129, %v126
    %v139 = vpack.c.b16 %v130, %v130
    %v140 = vpack.c.b16 %v131, %v131
    %v141 = vpack.c.b16 %v132, %v132
    %vm148 = vcmask 277504
    %v150 = vsel %vm148, %v107, 0
    %vm152 = vcmask 1040384
    %v154 = vsel %vm152, %v139, 0
    %v157 = vsel %vm152, %v140, 0
    %v160 = vsel %vm152, %v141, 0
    %162 = vmatprep.subr.bf16.mxu0 %v134
    %163 = vmatpush1.bf16.msra.mxu0 %v133
    %164 = vmatprep.subr.bf16.mxu0 %v137
    %165 = vmatpush1.bf16.msra.mxu0 %v136
    %166 = vmatprep.subr.bf16.mxu0 %v157
    %167 = vmatpush1.bf16.msra.mxu0 %v154
    %168 = vmatprep.subr.bf16.mxu0 0
    %169 = vmatpush1.bf16.msra.mxu0 0
    %170 = vmatprep.subr.bf16.mxu0 0
    %171 = vmatpush1.bf16.msra.mxu0 0
    %172 = vmatprep.subr.bf16.mxu0 0
    %173 = vmatpush1.bf16.msra.mxu0 0
    %174 = vmatprep.subr.bf16.mxu0 0
    %175 = vmatpush1.bf16.msra.mxu0 0
    %176 = vmatprep.subr.bf16.mxu0 0
    %177 = vmatpush1.bf16.msra.mxu0 0
    %178 = vmatprep.subr.bf16.mxu0 0
    %179 = vmatpush1.bf16.msra.mxu0 0
    %180 = vmatprep.subr.bf16.mxu0 0
    %181 = vmatpush1.bf16.msra.mxu0 0
    %182 = vmatprep.subr.bf16.mxu0 0
    %183 = vmatpush1.bf16.msra.mxu0 0
    %184 = vmatprep.subr.bf16.mxu0 0
    %185 = vmatpush1.bf16.msra.mxu0 0
    %186 = vmatprep.subr.bf16.mxu0 0
    %187 = vmatpush1.bf16.msra.mxu0 0
    %188 = vmatprep.subr.bf16.mxu0 0
    %189 = vmatpush1.bf16.msra.mxu0 0
    %190 = vmatprep.subr.bf16.mxu0 0
    %191 = vmatpush1.bf16.msra.mxu0 0
    %192 = vmatprep.subr.bf16.mxu0 0
    %193 = vmatpush1.bf16.msra.mxu0 0
    %194 = vmatprep.mubr.bf16.mxu0 0
    %195 = vmatmul.mubr.bf16.gmra.mrb[0].mxu0 %v150
    %v196 = vpop.f32.mrb[0].mxu0
    %v197 = vadd.f32 %v68, %v196
    %v198 = vpop.f32.mrb[0].mxu0
    %v199 = vadd.f32 %v72, %v198
    %v200 = vpop.f32.mrb[0].mxu0
    %v201 = vpop.f32.mrb[0].mxu0
    %202 = vdwg.mxu0
    %203 = vmatprep.subr.bf16.mxu0 0
    %204 = vmatpush1.bf16.msra.mxu0 %v135
    %205 = vmatprep.subr.bf16.mxu0 0
    %206 = vmatpush1.bf16.msra.mxu0 %v138
    %207 = vmatprep.subr.bf16.mxu0 0
    %208 = vmatpush1.bf16.msra.mxu0 %v160
    %209 = vmatprep.subr.bf16.mxu0 0
    %210 = vmatpush1.bf16.msra.mxu0 0
    %211 = vmatprep.subr.bf16.mxu0 0
    %212 = vmatpush1.bf16.msra.mxu0 0
    %213 = vmatprep.subr.bf16.mxu0 0
    %214 = vmatpush1.bf16.msra.mxu0 0
    %215 = vmatprep.subr.bf16.mxu0 0
    %216 = vmatpush1.bf16.msra.mxu0 0
    %217 = vmatprep.subr.bf16.mxu0 0
    %218 = vmatpush1.bf16.msra.mxu0 0
    %219 = vmatprep.subr.bf16.mxu0 0
    %220 = vmatpush1.bf16.msra.mxu0 0
    %221 = vmatprep.subr.bf16.mxu0 0
    %222 = vmatpush1.bf16.msra.mxu0 0
    %223 = vmatprep.subr.bf16.mxu0 0
    %224 = vmatpush1.bf16.msra.mxu0 0
    %225 = vmatprep.subr.bf16.mxu0 0
    %226 = vmatpush1.bf16.msra.mxu0 0
    %227 = vmatprep.subr.bf16.mxu0 0
    %228 = vmatpush1.bf16.msra.mxu0 0
    %229 = vmatprep.subr.bf16.mxu0 0
    %230 = vmatpush1.bf16.msra.mxu0 0
    %231 = vmatprep.subr.bf16.mxu0 0
    %232 = vmatpush1.bf16.msra.mxu0 0
    %233 = vmatprep.subr.bf16.mxu0 0
    %234 = vmatpush1.bf16.msra.mxu0 0
    %235 = vmatprep.mubr.bf16.mxu0 0
    %236 = vmatmul.mubr.bf16.gmra.mrb[0].mxu0 %v150
    %v237 = vpop.f32.mrb[0].mxu0
    %v238 = vadd.f32 %v76, %v237
    %v239 = vpop.f32.mrb[0].mxu0
    %v240 = vpop.f32.mrb[0].mxu0
    %v241 = vpop.f32.mrb[0].mxu0
    %242 = vdwg.mxu0
    %v243 = vpack.c.bf16 %v197, %v197
    %v244 = vpack.c.bf16 %v199, %v199
    %v245 = vpack.c.bf16 %v238, %v238
    %vm246 = vcmp.gt.bf16.partialorder %v243, 0
    %vm247 = vcmp.gt.bf16.partialorder %v244, 0
    %vm248 = vcmp.gt.bf16.partialorder %v245, 0
    %v249 = vmin.bf16 %v243, 0
    %v250 = vmin.bf16 %v244, 0
    %v251 = vmin.bf16 %v245, 0
    %v253 = vmul.bf16 %v249, 1069105081
    %v254 = vpow.bf16.pop %v253
    %v256 = vmul.bf16 %v250, 1069105081
    %v257 = vpow.bf16.pop %v256
    %v259 = vmul.bf16 %v251, 1069105081
    %v260 = vpow.bf16.pop %v259
    %v261 = vsub.bf16 %v254, 1065369472
    %v262 = vsub.bf16 %v257, 1065369472
    %v263 = vsub.bf16 %v260, 1065369472
    %v264 = vsel %vm246, %v243, %v261
    %v265 = vsel %vm247, %v244, %v262
    %v266 = vsel %vm248, %v245, %v263
    %v267 = vld [vmem:[%s3] sm:$0xff]
    %v268 = vld [vmem:[%s3 + $0x8] sm:$0xff]
    %v269 = vld [vmem:[%s3 + $0x10] sm:$0xff]
    %v270 = vld [vmem:[%s3 + $0x18] sm:$0xff]
    %v271 = vld [vmem:[%s3 + $0x20] sm:$0xff]
    %v272 = vld [vmem:[%s3 + $0x28] sm:$0xff]
    %v273 = vld [vmem:[%s3 + $0x30] sm:$0xff]
    %v274 = vld [vmem:[%s3 + $0x38] sm:$0xff]
    %v275 = vld [vmem:[%s3 + $0x40] sm:$0xff]
    %v276 = vld [vmem:[%s3 + $0x48] sm:$0xff]
    %v277 = vld [vmem:[%s3 + $0x50] sm:$0xff]
    %v278 = vld [vmem:[%s3 + $0x58] sm:$0xff]
    %v279 = vld [vmem:[%s3 + $0x60] sm:$0xff]
    %v280 = vld [vmem:[%s3 + $0x68] sm:$0xff]
    %v281 = vld [vmem:[%s3 + $0x70] sm:$0xff]
    %v282 = vld [vmem:[%s3 + $0x78] sm:$0xff]
    %v283 = vld [vmem:[%s3 + $0x80] sm:$0xff]
    %v284 = vld [vmem:[%s3 + $0x88] sm:$0xff]
    %v285 = vld [vmem:[%s3 + $0x90] sm:$0xff]
    %v286 = vld [vmem:[%s3 + $0x98] sm:$0xff]
    %v287 = vld [vmem:[%s3 + $0xa0] sm:$0xff]
    %v288 = vld [vmem:[%s3 + $0xa8] sm:$0xff]
    %v289 = vld [vmem:[%s3 + $0xb0] sm:$0xff]
    %v290 = vld [vmem:[%s3 + $0xb8] sm:$0xff]
    %v291 = vld [vmem:[%s3 + $0xc0] sm:$0xff]
    %v292 = vld [vmem:[%s3 + $0xc8] sm:$0xff]
    %v293 = vld [vmem:[%s3 + $0xd0] sm:$0xff]
    %v294 = vld [vmem:[%s3 + $0xd8] sm:$0xff]
    %v295 = vld [vmem:[%s3 + $0xe0] sm:$0xff]
    %v296 = vld [vmem:[%s3 + $0xe8] sm:$0xff]
    %v297 = vld [vmem:[%s3 + $0xf0] sm:$0xff]
    %v298 = vld [vmem:[%s3 + $0xf8] sm:$0xff]
    %v299 = vld [vmem:[%s4] sm:$0x3]
    %v301 = vlaneseq
    %v302 = vshrl.u32 %v301, 7
    %v303 = vsub.s32 0, %v302
    %v304 = vrot.slane %v299, %v303
    %v305 = vlaneseq
    %v306 = vshrl.u32 %v305, 7
    %v307 = vsub.s32 1, %v306
    %v308 = vrot.slane %v299, %v307
    %v343 = vunpack.c.l.b16 %v267
    %v344 = vunpack.c.h.b16 %v267
    %v345 = vunpack.c.l.b16 %v268
    %v346 = vunpack.c.h.b16 %v268
    %v347 = vunpack.c.l.b16 %v269
    %v348 = vunpack.c.h.b16 %v269
    %v349 = vunpack.c.l.b16 %v270
    %v350 = vunpack.c.h.b16 %v270
    %v351 = vunpack.c.l.b16 %v271
    %v352 = vunpack.c.h.b16 %v271
    %v353 = vunpack.c.l.b16 %v272
    %v354 = vunpack.c.h.b16 %v272
    %v355 = vunpack.c.l.b16 %v273
    %v356 = vunpack.c.h.b16 %v273
    %v357 = vunpack.c.l.b16 %v274
    %v358 = vunpack.c.h.b16 %v274
    %v359 = vunpack.c.l.b16 %v275
    %v360 = vunpack.c.h.b16 %v275
    %v361 = vunpack.c.l.b16 %v276
    %v362 = vunpack.c.h.b16 %v276
    %v363 = vunpack.c.l.b16 %v277
    %v364 = vunpack.c.h.b16 %v277
    %v365 = vunpack.c.l.b16 %v278
    %v366 = vunpack.c.h.b16 %v278
    %v367 = vunpack.c.l.b16 %v279
    %v368 = vunpack.c.h.b16 %v279
    %v369 = vunpack.c.l.b16 %v280
    %v370 = vunpack.c.h.b16 %v280
    %v371 = vunpack.c.l.b16 %v281
    %v372 = vunpack.c.h.b16 %v281
    %v373 = vunpack.c.l.b16 %v282
    %v374 = vunpack.c.h.b16 %v282
    %v375 = vunpack.c.l.b16 %v283
    %v376 = vunpack.c.h.b16 %v283
    %v377 = vunpack.c.l.b16 %v284
    %v378 = vunpack.c.h.b16 %v284
    %v379 = vunpack.c.l.b16 %v285
    %v380 = vunpack.c.h.b16 %v285
    %v381 = vunpack.c.l.b16 %v286
    %v382 = vunpack.c.h.b16 %v286
    %v383 = vunpack.c.l.b16 %v287
    %v384 = vunpack.c.h.b16 %v287
    %v385 = vunpack.c.l.b16 %v288
    %v386 = vunpack.c.h.b16 %v288
    %v387 = vunpack.c.l.b16 %v289
    %v388 = vunpack.c.h.b16 %v289
    %v389 = vunpack.c.l.b16 %v290
    %v390 = vunpack.c.h.b16 %v290
    %v391 = vunpack.c.l.b16 %v291
    %v392 = vunpack.c.h.b16 %v291
    %v393 = vunpack.c.l.b16 %v292
    %v394 = vunpack.c.h.b16 %v292
    %v395 = vunpack.c.l.b16 %v293
    %v396 = vunpack.c.h.b16 %v293
    %v397 = vunpack.c.l.b16 %v294
    %v398 = vunpack.c.h.b16 %v294
    %v399 = vunpack.c.l.b16 %v295
    %v400 = vunpack.c.h.b16 %v295
    %v401 = vunpack.c.l.b16 %v296
    %v402 = vunpack.c.h.b16 %v296
    %v403 = vunpack.c.l.b16 %v297
    %v404 = vunpack.c.h.b16 %v297
    %v405 = vunpack.c.l.b16 %v298
    %v406 = vunpack.c.h.b16 %v298
    %v407 = vpack.c.b16 %v345, %v343
    %v408 = vpack.c.b16 %v346, %v344
    %v409 = vpack.c.b16 %v349, %v347
    %v410 = vpack.c.b16 %v350, %v348
    %v411 = vpack.c.b16 %v353, %v351
    %v412 = vpack.c.b16 %v354, %v352
    %v413 = vpack.c.b16 %v357, %v355
    %v414 = vpack.c.b16 %v358, %v356
    %v415 = vpack.c.b16 %v361, %v359
    %v416 = vpack.c.b16 %v362, %v360
    %v417 = vpack.c.b16 %v365, %v363
    %v418 = vpack.c.b16 %v366, %v364
    %v419 = vpack.c.b16 %v369, %v367
    %v420 = vpack.c.b16 %v370, %v368
    %v421 = vpack.c.b16 %v373, %v371
    %v422 = vpack.c.b16 %v374, %v372
    %v423 = vpack.c.b16 %v377, %v375
    %v424 = vpack.c.b16 %v378, %v376
    %v425 = vpack.c.b16 %v381, %v379
    %v426 = vpack.c.b16 %v382, %v380
    %v427 = vpack.c.b16 %v385, %v383
    %v428 = vpack.c.b16 %v386, %v384
    %v429 = vpack.c.b16 %v389, %v387
    %v430 = vpack.c.b16 %v390, %v388
    %v431 = vpack.c.b16 %v393, %v391
    %v432 = vpack.c.b16 %v394, %v392
    %v433 = vpack.c.b16 %v397, %v395
    %v434 = vpack.c.b16 %v398, %v396
    %v435 = vpack.c.b16 %v401, %v399
    %v436 = vpack.c.b16 %v402, %v400
    %v437 = vpack.c.b16 %v405, %v403
    %v438 = vpack.c.b16 %v406, %v404
    %471 = vmatprep.subr.bf16.mxu0 %v408
    %472 = vmatpush1.bf16.msra.mxu0 %v407
    %473 = vmatprep.subr.bf16.mxu0 %v410
    %474 = vmatpush1.bf16.msra.mxu0 %v409
    %475 = vmatprep.subr.bf16.mxu0 %v412
    %476 = vmatpush1.bf16.msra.mxu0 %v411
    %477 = vmatprep.subr.bf16.mxu0 %v414
    %478 = vmatpush1.bf16.msra.mxu0 %v413
    %479 = vmatprep.subr.bf16.mxu0 %v416
    %480 = vmatpush1.bf16.msra.mxu0 %v415
    %481 = vmatprep.subr.bf16.mxu0 %v418
    %482 = vmatpush1.bf16.msra.mxu0 %v417
    %483 = vmatprep.subr.bf16.mxu0 %v420
    %484 = vmatpush1.bf16.msra.mxu0 %v419
    %485 = vmatprep.subr.bf16.mxu0 %v422
    %486 = vmatpush1.bf16.msra.mxu0 %v421
    %487 = vmatprep.subr.bf16.mxu0 %v424
    %488 = vmatpush1.bf16.msra.mxu0 %v423
    %489 = vmatprep.subr.bf16.mxu0 %v426
    %490 = vmatpush1.bf16.msra.mxu0 %v425
    %491 = vmatprep.subr.bf16.mxu0 %v428
    %492 = vmatpush1.bf16.msra.mxu0 %v427
    %493 = vmatprep.subr.bf16.mxu0 %v430
    %494 = vmatpush1.bf16.msra.mxu0 %v429
    %495 = vmatprep.subr.bf16.mxu0 %v432
    %496 = vmatpush1.bf16.msra.mxu0 %v431
    %497 = vmatprep.subr.bf16.mxu0 %v434
    %498 = vmatpush1.bf16.msra.mxu0 %v433
    %499 = vmatprep.subr.bf16.mxu0 %v436
    %500 = vmatpush1.bf16.msra.mxu0 %v435
    %501 = vmatprep.subr.bf16.mxu0 %v438
    %502 = vmatpush1.bf16.msra.mxu0 %v437
    %503 = vmatprep.mubr.bf16.mxu0 %v265
    %504 = vmatmul.mubr.bf16.gmra.mrb[0].mxu0 %v264
    %v505 = vpop.f32.mrb[0].mxu0
    %v506 = vadd.f32 %v304, %v505
    %v507 = vpop.f32.mrb[0].mxu0
    %v508 = vadd.f32 %v308, %v507
    %v509 = vpop.f32.mrb[0].mxu0
    %v510 = vpop.f32.mrb[0].mxu0
    %511 = vdwg.mxu0
    %v512 = vpack.c.bf16 %v506, %v506
    %v513 = vpack.c.bf16 %v508, %v508
    %vm514 = vcmp.gt.bf16.partialorder %v512, 0
    %vm515 = vcmp.gt.bf16.partialorder %v513, 0
    %v516 = vmin.bf16 %v512, 0
    %v517 = vmin.bf16 %v513, 0
    %v519 = vmul.bf16 %v516, 1069105081
    %v520 = vpow.bf16.pop %v519
    %v522 = vmul.bf16 %v517, 1069105081
    %v523 = vpow.bf16.pop %v522
    %v524 = vsub.bf16 %v520, 1065369472
    %v525 = vsub.bf16 %v523, 1065369472
    %v526 = vsel %vm514, %v512, %v524
    %v527 = vsel %vm515, %v513, %v525
    %v528 = vld [vmem:[%s5] sm:$0xf]
    %v529 = vld [vmem:[%s5 + $0x4] sm:$0xf]
    %v530 = vld [vmem:[%s5 + $0x8] sm:$0xf]
    %v531 = vld [vmem:[%s5 + $0xc] sm:$0xf]
    %v532 = vld [vmem:[%s5 + $0x10] sm:$0xf]
    %v533 = vld [vmem:[%s5 + $0x14] sm:$0xf]
    %v534 = vld [vmem:[%s5 + $0x18] sm:$0xf]
    %v535 = vld [vmem:[%s5 + $0x1c] sm:$0xf]
    %v536 = vld [vmem:[%s5 + $0x20] sm:$0xf]
    %v537 = vld [vmem:[%s5 + $0x24] sm:$0xf]
    %v538 = vld [vmem:[%s5 + $0x28] sm:$0xf]
    %v539 = vld [vmem:[%s5 + $0x2c] sm:$0xf]
    %v540 = vld [vmem:[%s5 + $0x30] sm:$0xf]
    %v541 = vld [vmem:[%s5 + $0x34] sm:$0xf]
    %v542 = vld [vmem:[%s5 + $0x38] sm:$0xf]
    %v543 = vld [vmem:[%s5 + $0x3c] sm:$0xf]
    %v544 = vld [vmem:[%s5 + $0x40] sm:$0xf]
    %v545 = vld [vmem:[%s5 + $0x44] sm:$0xf]
    %v546 = vld [vmem:[%s5 + $0x48] sm:$0xf]
    %v547 = vld [vmem:[%s5 + $0x4c] sm:$0xf]
    %v548 = vld [vmem:[%s5 + $0x50] sm:$0xf]
    %v549 = vld [vmem:[%s5 + $0x54] sm:$0xf]
    %v550 = vld [vmem:[%s5 + $0x58] sm:$0xf]
    %v551 = vld [vmem:[%s5 + $0x5c] sm:$0xf]
    %v552 = vld [vmem:[%s5 + $0x60] sm:$0xf]
    %v553 = vld [vmem:[%s5 + $0x64] sm:$0xf]
    %v554 = vld [vmem:[%s5 + $0x68] sm:$0xf]
    %v555 = vld [vmem:[%s5 + $0x6c] sm:$0xf]
    %v556 = vld [vmem:[%s5 + $0x70] sm:$0xf]
    %v557 = vld [vmem:[%s5 + $0x74] sm:$0xf]
    %v558 = vld [vmem:[%s5 + $0x78] sm:$0xf]
    %v559 = vld [vmem:[%s5 + $0x7c] sm:$0xf]
    %v560 = vld [vmem:[%s5 + $0x80] sm:$0xf]
    %v561 = vld [vmem:[%s5 + $0x84] sm:$0xf]
    %v562 = vld [vmem:[%s5 + $0x88] sm:$0xf]
    %v563 = vld [vmem:[%s5 + $0x8c] sm:$0xf]
    %v564 = vld [vmem:[%s5 + $0x90] sm:$0xf]
    %v565 = vld [vmem:[%s5 + $0x94] sm:$0xf]
    %v566 = vld [vmem:[%s5 + $0x98] sm:$0xf]
    %v567 = vld [vmem:[%s5 + $0x9c] sm:$0xf]
    %v568 = vld [vmem:[%s6] sm:$0x1]
    %v570 = vlaneseq
    %v571 = vshrl.u32 %v570, 7
    %v572 = vsub.s32 0, %v571
    %v573 = vrot.slane %v568, %v572
    %v615 = vunpack.c.l.b16 %v528
    %v616 = vunpack.c.l.b16 %v529
    %v617 = vunpack.c.l.b16 %v530
    %v618 = vunpack.c.l.b16 %v531
    %v619 = vunpack.c.l.b16 %v532
    %v620 = vunpack.c.l.b16 %v533
    %v621 = vunpack.c.l.b16 %v534
    %v622 = vunpack.c.l.b16 %v535
    %v623 = vunpack.c.l.b16 %v536
    %v624 = vunpack.c.l.b16 %v537
    %v625 = vunpack.c.l.b16 %v538
    %v626 = vunpack.c.l.b16 %v539
    %v627 = vunpack.c.l.b16 %v540
    %v628 = vunpack.c.l.b16 %v541
    %v629 = vunpack.c.l.b16 %v542
    %v630 = vunpack.c.l.b16 %v543
    %v631 = vunpack.c.l.b16 %v544
    %v632 = vunpack.c.l.b16 %v545
    %v633 = vunpack.c.l.b16 %v546
    %v634 = vunpack.c.l.b16 %v547
    %v635 = vunpack.c.l.b16 %v548
    %v636 = vunpack.c.l.b16 %v549
    %v637 = vunpack.c.l.b16 %v550
    %v638 = vunpack.c.l.b16 %v551
    %v639 = vunpack.c.l.b16 %v552
    %v640 = vunpack.c.l.b16 %v553
    %v641 = vunpack.c.l.b16 %v554
    %v642 = vunpack.c.l.b16 %v555
    %v643 = vunpack.c.l.b16 %v556
    %v644 = vunpack.c.l.b16 %v557
    %v645 = vunpack.c.l.b16 %v558
    %v646 = vunpack.c.l.b16 %v559
    %v647 = vunpack.c.l.b16 %v560
    %v648 = vunpack.c.l.b16 %v561
    %v649 = vunpack.c.l.b16 %v562
    %v650 = vunpack.c.l.b16 %v563
    %v651 = vunpack.c.l.b16 %v564
    %v652 = vunpack.c.l.b16 %v565
    %v653 = vunpack.c.l.b16 %v566
    %v654 = vunpack.c.l.b16 %v567
    %v655 = vpack.c.b16 %v616, %v615
    %v656 = vpack.c.b16 %v618, %v617
    %v657 = vpack.c.b16 %v620, %v619
    %v658 = vpack.c.b16 %v622, %v621
    %v659 = vpack.c.b16 %v624, %v623
    %v660 = vpack.c.b16 %v626, %v625
    %v661 = vpack.c.b16 %v628, %v627
    %v662 = vpack.c.b16 %v630, %v629
    %v663 = vpack.c.b16 %v632, %v631
    %v664 = vpack.c.b16 %v634, %v633
    %v665 = vpack.c.b16 %v636, %v635
    %v666 = vpack.c.b16 %v638, %v637
    %v667 = vpack.c.b16 %v640, %v639
    %v668 = vpack.c.b16 %v642, %v641
    %v669 = vpack.c.b16 %v644, %v643
    %v670 = vpack.c.b16 %v646, %v645
    %v671 = vpack.c.b16 %v648, %v647
    %v672 = vpack.c.b16 %v650, %v649
    %v673 = vpack.c.b16 %v652, %v651
    %v674 = vpack.c.b16 %v654, %v653
    %vm695 = vcmask 523264
    %v697 = vsel %vm695, %v266, 0
    %699 = vmatprep.subr.bf16.mxu0 0
    %700 = vmatpush1.bf16.msra.mxu0 %v655
    %701 = vmatprep.subr.bf16.mxu0 0
    %702 = vmatpush1.bf16.msra.mxu0 %v656
    %703 = vmatprep.subr.bf16.mxu0 0
    %704 = vmatpush1.bf16.msra.mxu0 %v657
    %705 = vmatprep.subr.bf16.mxu0 0
    %706 = vmatpush1.bf16.msra.mxu0 %v658
    %707 = vmatprep.subr.bf16.mxu0 0
    %708 = vmatpush1.bf16.msra.mxu0 %v659
    %709 = vmatprep.subr.bf16.mxu0 0
    %710 = vmatpush1.bf16.msra.mxu0 %v660
    %711 = vmatprep.subr.bf16.mxu0 0
    %712 = vmatpush1.bf16.msra.mxu0 %v661
    %713 = vmatprep.subr.bf16.mxu0 0
    %714 = vmatpush1.bf16.msra.mxu0 %v662
    %715 = vmatprep.subr.bf16.mxu0 0
    %716 = vmatpush1.bf16.msra.mxu0 %v663
    %717 = vmatprep.subr.bf16.mxu0 0
    %718 = vmatpush1.bf16.msra.mxu0 %v664
    %719 = vmatprep.subr.bf16.mxu0 0
    %720 = vmatpush1.bf16.msra.mxu0 %v665
    %721 = vmatprep.subr.bf16.mxu0 0
    %722 = vmatpush1.bf16.msra.mxu0 %v666
    %723 = vmatprep.subr.bf16.mxu0 0
    %724 = vmatpush1.bf16.msra.mxu0 %v667
    %725 = vmatprep.subr.bf16.mxu0 0
    %726 = vmatpush1.bf16.msra.mxu0 %v668
    %727 = vmatprep.subr.bf16.mxu0 0
    %728 = vmatpush1.bf16.msra.mxu0 %v669
    %729 = vmatprep.subr.bf16.mxu0 0
    %730 = vmatpush1.bf16.msra.mxu0 %v670
    %731 = vmatprep.mubr.bf16.mxu0 %v527
    %732 = vmatmul.mubr.bf16.gmra.mrb[0].mxu0 %v526
    %v733 = vpop.f32.mrb[0].mxu0
    %v734 = vadd.f32 %v573, %v733
    %v735 = vpop.f32.mrb[0].mxu0
    %v736 = vpop.f32.mrb[0].mxu0
    %v737 = vpop.f32.mrb[0].mxu0
    %738 = vdwg.mxu0
    %739 = vmatprep.subr.bf16.mxu0 0
    %740 = vmatpush1.bf16.msra.mxu0 %v671
    %741 = vmatprep.subr.bf16.mxu0 0
    %742 = vmatpush1.bf16.msra.mxu0 %v672
    %743 = vmatprep.subr.bf16.mxu0 0
    %744 = vmatpush1.bf16.msra.mxu0 %v673
    %745 = vmatprep.subr.bf16.mxu0 0
    %746 = vmatpush1.bf16.msra.mxu0 %v674
    %747 = vmatprep.subr.bf16.mxu0 0
    %748 = vmatpush1.bf16.msra.mxu0 0
    %749 = vmatprep.subr.bf16.mxu0 0
    %750 = vmatpush1.bf16.msra.mxu0 0
    %751 = vmatprep.subr.bf16.mxu0 0
    %752 = vmatpush1.bf16.msra.mxu0 0
    %753 = vmatprep.subr.bf16.mxu0 0
    %754 = vmatpush1.bf16.msra.mxu0 0
    %755 = vmatprep.subr.bf16.mxu0 0
    %756 = vmatpush1.bf16.msra.mxu0 0
    %757 = vmatprep.subr.bf16.mxu0 0
    %758 = vmatpush1.bf16.msra.mxu0 0
    %759 = vmatprep.subr.bf16.mxu0 0
    %760 = vmatpush1.bf16.msra.mxu0 0
    %761 = vmatprep.subr.bf16.mxu0 0
    %762 = vmatpush1.bf16.msra.mxu0 0
    %763 = vmatprep.subr.bf16.mxu0 0
    %764 = vmatpush1.bf16.msra.mxu0 0
    %765 = vmatprep.subr.bf16.mxu0 0
    %766 = vmatpush1.bf16.msra.mxu0 0
    %767 = vmatprep.subr.bf16.mxu0 0
    %768 = vmatpush1.bf16.msra.mxu0 0
    %769 = vmatprep.subr.bf16.mxu0 0
    %770 = vmatpush1.bf16.msra.mxu0 0
    %771 = vmatprep.mubr.bf16.mxu0 0
    %772 = vmatmul.mubr.bf16.gmra.mrb[0].mxu0 %v697
    %v773 = vpop.f32.mrb[0].mxu0
    %v774 = vadd.f32 %v734, %v773
    %v775 = vpop.f32.mrb[0].mxu0
    %v776 = vpop.f32.mrb[0].mxu0
    %v777 = vpop.f32.mrb[0].mxu0
    %778 = vdwg.mxu0
    %v779 = vpack.c.bf16 %v774, %v774
    %vm780 = vcmp.gt.bf16.partialorder %v779, 0
    %v781 = vmin.bf16 %v779, 0
    %v783 = vmul.bf16 %v781, 1069105081
    %v784 = vpow.bf16.pop %v783
    %v785 = vsub.bf16 %v784, 1065369472
    %v786 = vsel %vm780, %v779, %v785
    %v787 = vld [vmem:[%s7] sm:$0xf]
    %v788 = vld [vmem:[%s7 + $0x4] sm:$0xf]
    %v789 = vld [vmem:[%s7 + $0x8] sm:$0xf]
    %v790 = vld [vmem:[%s7 + $0xc] sm:$0xf]
    %v791 = vld [vmem:[%s7 + $0x10] sm:$0xf]
    %v792 = vld [vmem:[%s7 + $0x14] sm:$0xf]
    %v793 = vld [vmem:[%s7 + $0x18] sm:$0xf]
    %v794 = vld [vmem:[%s7 + $0x1c] sm:$0xf]
    %v795 = vld [vmem:[%s8] sm:$0x1]
    %v797 = vlaneseq
    %v798 = vshrl.u32 %v797, 7
    %v799 = vsub.s32 0, %v798
    %v800 = vrot.slane %v795, %v799
    %v810 = vunpack.c.l.b16 %v787
    %v811 = vunpack.c.l.b16 %v788
    %v812 = vunpack.c.l.b16 %v789
    %v813 = vunpack.c.l.b16 %v790
    %v814 = vunpack.c.l.b16 %v791
    %v815 = vunpack.c.l.b16 %v792
    %v816 = vunpack.c.l.b16 %v793
    %v817 = vunpack.c.l.b16 %v794
    %v818 = vpack.c.b16 %v811, %v810
    %v819 = vpack.c.b16 %v813, %v812
    %v820 = vpack.c.b16 %v815, %v814
    %v821 = vpack.c.b16 %v817, %v816
    %v827 = vsel %vm695, %v786, 0
    %829 = vmatprep.subr.bf16.mxu0 0
    %830 = vmatpush1.bf16.msra.mxu0 %v818
    %831 = vmatprep.subr.bf16.mxu0 0
    %832 = vmatpush1.bf16.msra.mxu0 %v819
    %833 = vmatprep.subr.bf16.mxu0 0
    %834 = vmatpush1.bf16.msra.mxu0 %v820
    %835 = vmatprep.subr.bf16.mxu0 0
    %836 = vmatpush1.bf16.msra.mxu0 %v821
    %837 = vmatprep.subr.bf16.mxu0 0
    %838 = vmatpush1.bf16.msra.mxu0 0
    %839 = vmatprep.subr.bf16.mxu0 0
    %840 = vmatpush1.bf16.msra.mxu0 0
    %841 = vmatprep.subr.bf16.mxu0 0
    %842 = vmatpush1.bf16.msra.mxu0 0
    %843 = vmatprep.subr.bf16.mxu0 0
    %844 = vmatpush1.bf16.msra.mxu0 0
    %845 = vmatprep.subr.bf16.mxu0 0
    %846 = vmatpush1.bf16.msra.mxu0 0
    %847 = vmatprep.subr.bf16.mxu0 0
    %848 = vmatpush1.bf16.msra.mxu0 0
    %849 = vmatprep.subr.bf16.mxu0 0
    %850 = vmatpush1.bf16.msra.mxu0 0
    %851 = vmatprep.subr.bf16.mxu0 0
    %852 = vmatpush1.bf16.msra.mxu0 0
    %853 = vmatprep.subr.bf16.mxu0 0
    %854 = vmatpush1.bf16.msra.mxu0 0
    %855 = vmatprep.subr.bf16.mxu0 0
    %856 = vmatpush1.bf16.msra.mxu0 0
    %857 = vmatprep.subr.bf16.mxu0 0
    %858 = vmatpush1.bf16.msra.mxu0 0
    %859 = vmatprep.subr.bf16.mxu0 0
    %860 = vmatpush1.bf16.msra.mxu0 0
    %861 = vmatprep.mubr.bf16.mxu0 0
    %862 = vmatmul.mubr.bf16.gmra.mrb[0].mxu0 %v827
    %v863 = vpop.f32.mrb[0].mxu0
    %v864 = vadd.f32 %v800, %v863
    %v865 = vpop.f32.mrb[0].mxu0
    %v866 = vpop.f32.mrb[0].mxu0
    %v867 = vpop.f32.mrb[0].mxu0
    %868 = vdwg.mxu0
    %v869 = vtanh.pop %v864
    %vm870 = vcmask 261120
    %871 = vst.msk [vmem:[#allocation5] sm:$0xff] %vm870, %v869
    // Predicated region
    $region42: #{tpu_custom_call.1} parent=1 // pred_check
      _
    $region43: #{tpu_custom_call.1} parent=1 // pred_check_branch
      %873 = sbr.rel (0) target = $region45
    $region44: #{tpu_custom_call.1} parent=1 // pred_region
      %s875 = ssub.s32 128, 32
      %876 = vsyncadd [#allocation4], %s875
      %s877 = sshll.u32 [#allocation5], 4
      %s878 = int_to_ptr.vmem [resolvable:$true] %s877
      %883 = dma.vmem_to_hbm [thread:$0]  %s878, 32, %s9, [#allocation4], 32, 32, 2
    $region45: #{tpu_custom_call.1} parent=1 // pred_fallthru
      _
    // Predicated region
    $region46: #{tpu_custom_call.1} parent=1 // pred_check
      _
    $region47: #{tpu_custom_call.1} parent=1 // pred_check_branch
      %885 = sbr.rel (0) target = $region49
    $region48: #{tpu_custom_call.1} parent=1 // pred_region
      %886 = dma.done [#allocation4], 128
    $region49: #{tpu_custom_call.1} parent=1 // pred_fallthru
      _
    %887 = vsyncpa [#allocation3], 1
    %888 = vsyncpa [#allocation4], 1

</llo_original>
